<compile_context>
chip_gen: v7x
topology: tpu7x:2x2x1
jax: 0.10.0
libtpu: 0.0.40
codegen_flags: <defaults>
</compile_context>

<pallas_src>
import functools
import math

import jax
import jax.numpy as jnp
from jax import lax
from jax.experimental import pallas as pl
from jax.experimental.pallas import tpu as pltpu

_MASK_NEG = -1e30  # finite "-inf": masked keys underflow to 0 in exp


def _compute_vmem_limit():
    cap = 64 * 1024 * 1024
    try:
        info_fn = getattr(pltpu, "get_tpu_info", None)
        if info_fn is not None:
            cap = int(getattr(info_fn(), "vmem_capacity_bytes", cap))
    except Exception:
        pass
    # leave headroom for Mosaic internals; 48 MiB on v7x (64), 100 MiB on v5e/v6e (128)
    return min(max(cap - 16 * 1024 * 1024, 32 * 1024 * 1024), 100 * 1024 * 1024)


_VMEM_LIMIT = _compute_vmem_limit()


def _pick_row_tile(m):
    for t in (512, 256, 128, 64, 32, 16, 8):
        if m % t == 0:
            return t
    return m  # TODO(synk): ceil-div + padded trailing block for awkward row counts


def _pick_col_tile(kdim, n, budget_bytes=8 * 1024 * 1024):
    if kdim * n * 2 <= budget_bytes:
        return n
    for t in (2048, 1024, 512, 256, 128):
        if n % t == 0 and kdim * t * 2 <= budget_bytes:
            return t
    return n


def _pick_seq_tile(s):
    if s <= 512:
        return s
    for t in (512, 384, 256, 128):
        if s % t == 0:
            return t
    return s


# ---------------------------------------------------------------------------
# Linear projection kernel: (M, N)-tiled matmul + bias (bf16 MXU, f32 accumulate)
# ---------------------------------------------------------------------------

def _linear_kernel(x_ref, w_ref, b_ref, o_ref):
    x = x_ref[...].astype(jnp.bfloat16)  # no-op if already bf16
    acc = jnp.dot(x, w_ref[...], preferred_element_type=jnp.float32) + b_ref[...]
    o_ref[...] = acc.astype(o_ref.dtype)


def pallas_linear(x2d, w, b, out_dtype=jnp.bfloat16):
    m, kdim = x2d.shape
    n = w.shape[1]
    tm = _pick_row_tile(m)
    tn = _pick_col_tile(kdim, n)
    w_bf = w.astype(jnp.bfloat16)  # MXU-native weights
    b2 = b.reshape(1, n).astype(jnp.float32)
    return pl.pallas_call(
        _linear_kernel,
        out_shape=jax.ShapeDtypeStruct((m, n), out_dtype),
        grid=(m // tm, n // tn),
        in_specs=[
            pl.BlockSpec((tm, kdim), lambda i, j: (i, 0)),
            pl.BlockSpec((kdim, tn), lambda i, j: (0, j)),
            pl.BlockSpec((1, tn), lambda i, j: (0, j)),
        ],
        out_specs=pl.BlockSpec((tm, tn), lambda i, j: (i, j)),
        compiler_params=pltpu.CompilerParams(
            dimension_semantics=("parallel", "parallel"),
            vmem_limit_bytes=_VMEM_LIMIT),
    )(x2d, w_bf, b2)


# ---------------------------------------------------------------------------
# Fused augmented-geometry attention core (flash-style online softmax, no log)
# ---------------------------------------------------------------------------

def _attn_kernel(q_ref, k_ref, v_ref, mask_ref, g_ref, o_ref,
                 m_sc, l_sc, acc_sc, *, nh, d_v):
    # Per (batch, q_tile, kv_tile) step (head-major layouts):
    #   q: (H, tq, d_k) bf16, k: (H, tk, d_k) bf16, v: (H, tk, d_v) bf16
    #   mask: (tq, tk) int8, g: (H_or_1, tq, tk) bf16, out: (tq, H*d_v)
    #   scratch: m/l (H, tq, 1) f32, acc (H, tq, d_v) f32
    kv = pl.program_id(2)

    @pl.when(kv == 0)
    def _init():
        m_sc[...] = jnp.full_like(m_sc, -jnp.inf)
        l_sc[...] = jnp.zeros_like(l_sc)
        acc_sc[...] = jnp.zeros_like(acc_sc)

    # Additive mask computed once and shared by every head (un-broadcast in HBM).
    neg_mask = jnp.where(mask_ref[...] != 0,
                         jnp.float32(_MASK_NEG), jnp.float32(0.0))        # (tq, tk)

    g_heads = g_ref.shape[0]  # 1 if geometry weights are shared across heads

    # TODO(synk): for very large H switch this static unroll to lax.fori_loop to
    # bound live ranges (fine at the H<=8 sizes exercised here).
    for head in range(nh):
        q_h = q_ref[head]                                                 # (tq, d_k)
        k_h = k_ref[head]                                                 # (tk, d_k)
        v_h = v_ref[head]                                                 # (tk, d_v)
        g_h = jnp.maximum(g_ref[head if g_heads > 1 else 0].astype(jnp.float32),
                          jnp.float32(1e-6))                              # (tq, tk)

        # scores = q @ k^T (scale already folded into wq/bq), no explicit transpose.
        s = lax.dot_general(q_h, k_h, (((1,), (1,)), ((), ())),
                            preferred_element_type=jnp.float32)
        s = s + neg_mask

        m_prev = m_sc[head]                                               # (tq, 1)
        m_new = jnp.maximum(m_prev, jnp.max(s, axis=-1, keepdims=True))
        alpha = jnp.exp(m_prev - m_new)                                   # (tq, 1)
        # softmax(log g + s) == normalize_k( g * exp(s - m) )  -> one exp, no log
        p = jnp.exp(s - m_new) * g_h                                      # (tq, tk) f32

        l_sc[head] = alpha * l_sc[head] + jnp.sum(p, axis=-1, keepdims=True)
        acc_sc[head] = alpha * acc_sc[head] + jnp.dot(
            p.astype(v_h.dtype), v_h, preferred_element_type=jnp.float32)
        m_sc[head] = m_new

    @pl.when(kv == pl.num_programs(2) - 1)
    def _finalize():
        # One-time (H, tq, d_v) -> (tq, H*d_v) interleave into the output block;
        # per-head reciprocal rides the otherwise-idle EUP slot.
        for head in range(nh):
            inv_l = pl.reciprocal(l_sc[head], approx=True)                # (tq, 1)
            o_ref[:, head * d_v:(head + 1) * d_v] = (
                acc_sc[head] * inv_l).astype(o_ref.dtype)


def pallas_attention_core(q, k, v, mask, g, *, d_k, d_v, h,
                          out_dtype=jnp.bfloat16):
    # q: (B, H, nq, d_k) bf16, k: (B, H, nk, d_k) bf16, v: (B, H, nk, d_v) bf16
    # mask: (Bm, 1, nq, nk) int8, g: (Bg, H_or_1, nq, nk) bf16
    # -> out: (B, nq, H*d_v)
    b_s, _, nq, _ = q.shape
    nk = k.shape[2]
    tq = _pick_seq_tile(nq)
    tk = _pick_seq_tile(nk)
    n_q, n_kv = nq // tq, nk // tk

    mb, gb, gh = mask.shape[0], g.shape[0], g.shape[1]
    mask_idx = ((lambda b, qi, j: (b, 0, qi, j)) if mb > 1
                else (lambda b, qi, j: (0, 0, qi, j)))
    g_idx = ((lambda b, qi, j: (b, 0, qi, j)) if gb > 1
             else (lambda b, qi, j: (0, 0, qi, j)))

    kernel = functools.partial(_attn_kernel, nh=h, d_v=d_v)
    return pl.pallas_call(
        kernel,
        out_shape=jax.ShapeDtypeStruct((b_s, nq, h * d_v), out_dtype),
        grid=(b_s, n_q, n_kv),
        in_specs=[
            pl.BlockSpec((None, h, tq, d_k), lambda b, qi, j: (b, 0, qi, 0)),
            pl.BlockSpec((None, h, tk, d_k), lambda b, qi, j: (b, 0, j, 0)),
            pl.BlockSpec((None, h, tk, d_v), lambda b, qi, j: (b, 0, j, 0)),
            pl.BlockSpec((None, None, tq, tk), mask_idx),
            pl.BlockSpec((None, gh, tq, tk), g_idx),
        ],
        out_specs=pl.BlockSpec((None, tq, h * d_v), lambda b, qi, j: (b, qi, 0)),
        scratch_shapes=[
            pltpu.VMEM((h, tq, 1), jnp.float32),      # running max (per head)
            pltpu.VMEM((h, tq, 1), jnp.float32),      # running sum  (per head)
            pltpu.VMEM((h, tq, d_v), jnp.float32),    # running accumulator
        ],
        compiler_params=pltpu.CompilerParams(
            dimension_semantics=("parallel", "parallel", "arbitrary"),
            vmem_limit_bytes=_VMEM_LIMIT),
    )(q, k, v, mask, g)


# ---------------------------------------------------------------------------
# Module forward (glue in plain JAX, hot path in Pallas)
# ---------------------------------------------------------------------------

def _as_4d(x):
    while x.ndim < 4:
        x = x[None]
    return x


def augmented_geometry_attention(params, queries, keys, values, attention_mask,
                                 relative_geometry_weights, *, d_k, d_v, h):
    b_s, nq, d_model = queries.shape
    nk = keys.shape[1]
    scale = 1.0 / math.sqrt(d_k)

    # Fold 1/sqrt(d_k) into the Q projection (no per-score scaling in the kernel).
    wq_s = params["wq"] * scale
    bq_s = params["bq"] * scale
    q_flat = pallas_linear(queries.reshape(b_s * nq, d_model), wq_s, bq_s)

    # Fuse K/V projections when they read the same activations (e.g. self-attn).
    if keys is values:
        wkv = jnp.concatenate([params["wk"], params["wv"]], axis=1)
        bkv = jnp.concatenate([params["bk"], params["bv"]], axis=0)
        kv_flat = pallas_linear(keys.reshape(b_s * nk, d_model), wkv, bkv)
        k_flat = kv_flat[:, :h * d_k]
        v_flat = kv_flat[:, h * d_k:]
    else:
        k_flat = pallas_linear(keys.reshape(b_s * nk, d_model),
                               params["wk"], params["bk"])
        v_flat = pallas_linear(values.reshape(b_s * nk, d_model),
                               params["wv"], params["bv"])

    # One-time head-major relayout -> zero-cost leading-axis head views in-kernel.
    q = q_flat.reshape(b_s, nq, h, d_k).transpose(0, 2, 1, 3)   # (B, H, nq, d_k)
    k = k_flat.reshape(b_s, nk, h, d_k).transpose(0, 2, 1, 3)   # (B, H, nk, d_k)
    v = v_flat.reshape(b_s, nk, h, d_v).transpose(0, 2, 1, 3)   # (B, H, nk, d_v)

    # Mask: int8, NOT broadcast over heads (shared per step); batch broadcast is
    # folded into the index_map.  TODO(synk): per-head masks (head dim > 1) would
    # need a per-head mask path in the kernel.
    mask = _as_4d(jnp.asarray(attention_mask)).astype(jnp.int8)

    # g: native layout, bf16, no batch/head broadcast materialization.
    g = _as_4d(jnp.asarray(relative_geometry_weights)).astype(jnp.bfloat16)

    heads = pallas_attention_core(q, k, v, mask, g, d_k=d_k, d_v=d_v, h=h)
    out = pallas_linear(heads.reshape(b_s * nq, h * d_v),
                        params["wo"], params["bo"], out_dtype=jnp.float32)
    return out.reshape(b_s, nq, d_model)


def reference_forward(params, queries, keys, values, attention_mask,
                      relative_geometry_weights, *, d_k, d_v, h):
    b_s, nq, d_model = queries.shape
    nk = keys.shape[1]
    q = (queries @ params["wq"] + params["bq"]).reshape(b_s, nq, h, d_k).transpose(0, 2, 1, 3)
    k = (keys @ params["wk"] + params["bk"]).reshape(b_s, nk, h, d_k).transpose(0, 2, 3, 1)
    v = (values @ params["wv"] + params["bv"]).reshape(b_s, nk, h, d_v).transpose(0, 2, 1, 3)
    a = jnp.einsum("bhqd,bhdk->bhqk", q, k) / jnp.sqrt(jnp.asarray(d_k, jnp.float32))
    a = jnp.where(jnp.broadcast_to(attention_mask, a.shape), -jnp.inf, a)
    mn = jnp.log(jnp.clip(relative_geometry_weights, 1e-6)) + a
    mn = jax.nn.softmax(mn, axis=-1)
    out = jnp.einsum("bhqk,bhkd->bhqd", mn, v).transpose(0, 2, 1, 3).reshape(b_s, nq, h * d_v)
    return out @ params["wo"] + params["bo"]


# ---------------------------------------------------------------------------
# Driver
# ---------------------------------------------------------------------------

if __name__ == "__main__":
    b_s, nq, nk = 2, 8, 8
    d_model, d_k, d_v, h = 32, 16, 16, 4

    root = jax.random.PRNGKey(0)
    ks = jax.random.split(root, 12)
    init = lambda kk, shape, s=0.05: s * jax.random.normal(kk, shape, jnp.float32)

    params = {
        "wq": init(ks[0], (d_model, h * d_k)), "bq": init(ks[1], (h * d_k,)),
        "wk": init(ks[2], (d_model, h * d_k)), "bk": init(ks[3], (h * d_k,)),
        "wv": init(ks[4], (d_model, h * d_v)), "bv": init(ks[5], (h * d_v,)),
        "wo": init(ks[6], (h * d_v, d_model)), "bo": init(ks[7], (d_model,)),
    }

    queries = jax.random.normal(ks[8], (b_s, nq, d_model), jnp.float32)
    kv = jax.random.normal(ks[9], (b_s, nk, d_model), jnp.float32)
    rel_geom = jax.nn.relu(jax.random.normal(ks[10], (b_s, h, nq, nk), jnp.float32))
    # boolean attention mask, broadcastable to (B, H, nq, nk); mask out last 2 keys
    attention_mask = jnp.zeros((b_s, 1, nq, nk), jnp.bool_).at[..., nk - 2:].set(True)

    out = augmented_geometry_attention(
        params, queries, kv, kv, attention_mask, rel_geom, d_k=d_k, d_v=d_v, h=h)
    out = jax.block_until_ready(out)

    ref = reference_forward(
        params, queries, kv, kv, attention_mask, rel_geom, d_k=d_k, d_v=d_v, h=h)
    assert out.shape == (b_s, nq, d_model)
    # tolerance covers bf16 MXU operands, bf16 g, and the approximate EUP reciprocal
    assert jnp.allclose(out, ref, atol=2e-2, rtol=2e-2), "mismatch vs. JAX reference"

    print("KERNEL_OK")
</pallas_src>

<mosaic_0001>
module attributes {stable_mosaic.version = 11 : i64} {
  func.func @_linear_kernel(%arg0: i32, %arg1: i32, %arg2: memref<16x32xf32, #tpu.memory_space<vmem>>, %arg3: memref<32x64xbf16, #tpu.memory_space<vmem>>, %arg4: memref<1x64xf32, #tpu.memory_space<vmem>>, %arg5: memref<16x64xbf16, #tpu.memory_space<vmem>>) attributes {dimension_semantics = [#tpu.dimension_semantics<parallel>, #tpu.dimension_semantics<parallel>], iteration_bounds = array<i64: 1, 1>, scalar_prefetch = 0 : i64, scratch_operands = 0 : i64, tpu.core_type = #tpu.core_type<tc>, window_params = [{transform_indices = @transform_0, window_bounds = array<i64: 16, 32>}, {transform_indices = @transform_1, window_bounds = array<i64: 32, 64>}, {transform_indices = @transform_2, window_bounds = array<i64: 1, 64>}, {transform_indices = @transform_3, window_bounds = array<i64: 16, 64>}]} {
    %c0 = arith.constant 0 : index
    %c0_0 = arith.constant 0 : index
    %0 = vector.load %arg2[%c0, %c0_0] : memref<16x32xf32, #tpu.memory_space<vmem>>, vector<16x32xf32>
    %1 = arith.truncf %0 : vector<16x32xf32> to vector<16x32xbf16>
    %c0_1 = arith.constant 0 : index
    %c0_2 = arith.constant 0 : index
    %2 = vector.load %arg3[%c0_1, %c0_2] : memref<32x64xbf16, #tpu.memory_space<vmem>>, vector<32x64xbf16>
    %cst = arith.constant dense<0.000000e+00> : vector<16x64xf32>
    %3 = tpu.matmul %1, %2, %cst {dimension_numbers = #tpu.dot_dimension_numbers<[1], [0], [0], [1], [0, 0, 1, 1], [], []>} : vector<16x32xbf16>, vector<32x64xbf16>, vector<16x64xf32> -> vector<16x64xf32>
    %c0_3 = arith.constant 0 : index
    %c0_4 = arith.constant 0 : index
    %4 = vector.load %arg4[%c0_3, %c0_4] : memref<1x64xf32, #tpu.memory_space<vmem>>, vector<1x64xf32>
    %5 = vector.broadcast %4 : vector<1x64xf32> to vector<16x64xf32>
    %6 = arith.addf %3, %5 : vector<16x64xf32>
    %7 = arith.truncf %6 : vector<16x64xf32> to vector<16x64xbf16>
    %c0_5 = arith.constant 0 : index
    %c0_6 = arith.constant 0 : index
    %8 = vector.load %arg5[%c0_5, %c0_6] : memref<16x64xbf16, #tpu.memory_space<vmem>>, vector<16x64xbf16>
    tpu.vector_store %arg5[%c0_5, %c0_6], %7 {strides = array<i32>} : memref<16x64xbf16, #tpu.memory_space<vmem>>, vector<16x64xbf16>,
    return
  }
  func.func @transform_0(%arg0: i32, %arg1: i32) -> (i32, i32) {
    %c0_i32 = arith.constant 0 : i32
    %c0_i32_0 = arith.constant 0 : i32
    return %arg0, %c0_i32 : i32, i32
  }
  func.func @transform_1(%arg0: i32, %arg1: i32) -> (i32, i32) {
    %c0_i32 = arith.constant 0 : i32
    %c0_i32_0 = arith.constant 0 : i32
    return %c0_i32, %arg1 : i32, i32
  }
  func.func @transform_2(%arg0: i32, %arg1: i32) -> (i32, i32) {
    %c0_i32 = arith.constant 0 : i32
    %c0_i32_0 = arith.constant 0 : i32
    return %c0_i32, %arg1 : i32, i32
  }
  func.func @transform_3(%arg0: i32, %arg1: i32) -> (i32, i32) {
    %c0_i32 = arith.constant 0 : i32
    return %arg0, %arg1 : i32, i32
  }
}

</mosaic_0001>

<llo_original>
// kernel: tpu_custom_call.1
$region0: #{tpu_custom_call.1}
  #allocation0 [shape = 'u32[]', space=smem, size = 0x4, offset = 0x4, fixed_abs, tag = 'smem constant byte address 0x4 - core index']
  #allocation1 [shape = 'u32[144,128]{1,0:T(1,128)}', space=vmem, size = 0x12000, scoped, tag = 'internal scratch']
  %s0 = inlined_call_operand.hbm [shape: f32[16,32], index: 0, kind: input, shape index: {}]
  %s1 = inlined_call_operand.hbm [shape: bf16[32,64], index: 1, kind: input, shape index: {}]
  %s2 = inlined_call_operand.vmem [shape: f32[1,64], index: 2, kind: input, shape index: {}]
  %s3 = inlined_call_operand.hbm [shape: bf16[16,64], index: 3, kind: output, shape index: {}]
  %s4 = sld [smem:[#allocation0]]
  $region30: #{tpu_custom_call.1} parent=0
    _
  %s6 = ssub.s32 1, %s4
  %s7 = scalar_select 0, %s6, %s4
  $region1: #{tpu_custom_call.1} parent=0
    #allocation2 [shape = 'u8[8192]{0}', space=vmem, size = 0x2000, scoped, tag = 'input window, operand 0, single buffered']
    #allocation3 [shape = 's32[1]{0}', space=sflag, size = 0x4, scoped, tag = 'scoped memory for tpu_custom_call.1']
    #allocation4 [shape = 's32[1]{0}', space=sflag, size = 0x4, scoped, tag = 'scoped memory for tpu_custom_call.1']
    #allocation5 [shape = 'u8[8192]{0}', space=vmem, size = 0x2000, scoped, tag = 'input window, operand 1, single buffered']
    #allocation6 [shape = 's32[1]{0}', space=sflag, size = 0x4, scoped, tag = 'scoped memory for tpu_custom_call.1']
    #allocation7 [shape = 'u8[4096]{0}', space=vmem, size = 0x1000, scoped, tag = 'output window, operand 0, single buffered']
    %8 = vsyncpa [#allocation3], 0
    %9 = vsyncpa [#allocation6], 0
    %10 = vsyncpa [#allocation4], 0
    // Predicated region
    $region2: #{tpu_custom_call.1} parent=1 // pred_check
      _
    $region3: #{tpu_custom_call.1} parent=1 // pred_check_branch
      %12 = sbr.rel (0) target = $region5
    $region4: #{tpu_custom_call.1} parent=1 // pred_region
      %s14 = ssub.s32 256, 256
      %15 = vsyncadd [#allocation3], %s14
      %s16 = sshll.u32 [#allocation2], 4
      %s17 = int_to_ptr.vmem [resolvable:$true] %s16
      %22 = dma.hbm_to_vmem [thread:$0]  %s0, 256, %s17, [#allocation3], 128, 128, 8
    $region5: #{tpu_custom_call.1} parent=1 // pred_fallthru
      _
    // Predicated region
    $region6: #{tpu_custom_call.1} parent=1 // pred_check
      _
    $region7: #{tpu_custom_call.1} parent=1 // pred_check_branch
      %24 = sbr.rel (0) target = $region9
    $region8: #{tpu_custom_call.1} parent=1 // pred_region
      %s26 = ssub.s32 256, 256
      %27 = vsyncadd [#allocation6], %s26
      %s28 = sshll.u32 [#allocation5], 4
      %s29 = int_to_ptr.vmem [resolvable:$true] %s28
      %34 = dma.hbm_to_vmem [thread:$0]  %s1, 256, %s29, [#allocation6], 64, 64, 4
    $region9: #{tpu_custom_call.1} parent=1 // pred_fallthru
      _
    // Predicated region
    $region10: #{tpu_custom_call.1} parent=1 // pred_check
      _
    $region11: #{tpu_custom_call.1} parent=1 // pred_check_branch
      %36 = sbr.rel (0) target = $region13
    $region12: #{tpu_custom_call.1} parent=1 // pred_region
      _
    $region13: #{tpu_custom_call.1} parent=1 // pred_fallthru
      _
    // Predicated region
    $region14: #{tpu_custom_call.1} parent=1 // pred_check
      _
    $region15: #{tpu_custom_call.1} parent=1 // pred_check_branch
      %38 = sbr.rel (0) target = $region17
    $region16: #{tpu_custom_call.1} parent=1 // pred_region
      %39 = dma.done [#allocation3], 256
    $region17: #{tpu_custom_call.1} parent=1 // pred_fallthru
      _
    // Predicated region
    $region18: #{tpu_custom_call.1} parent=1 // pred_check
      _
    $region19: #{tpu_custom_call.1} parent=1 // pred_check_branch
      %41 = sbr.rel (0) target = $region21
    $region20: #{tpu_custom_call.1} parent=1 // pred_region
      %42 = dma.done [#allocation6], 256
    $region21: #{tpu_custom_call.1} parent=1 // pred_fallthru
      _
    %v44 = vld [vmem:[#allocation2] sm:$0xff]
    %v45 = vld [vmem:[#allocation2 + $0x8] sm:$0xff]
    %v46 = vpack.c.bf16 %v45, %v44
    %v47 = vld [vmem:[#allocation5] sm:$0xf]
    %v48 = vld [vmem:[#allocation5 + $0x4] sm:$0xf]
    %v49 = vld [vmem:[#allocation5 + $0x8] sm:$0xf]
    %v50 = vld [vmem:[#allocation5 + $0xc] sm:$0xf]
    %v51 = vld [vmem:[%s2] sm:$0x1]
    %v53 = vlaneseq
    %v54 = vshrl.u32 %v53, 7
    %v55 = vsub.s32 0, %v54
    %v56 = vrot.slane %v51, %v55
    %v62 = vunpack.c.l.b16 %v47
    %v63 = vunpack.c.l.b16 %v48
    %v64 = vunpack.c.l.b16 %v49
    %v65 = vunpack.c.l.b16 %v50
    %v66 = vpack.c.b16 %v63, %v62
    %v67 = vpack.c.b16 %v65, %v64
    %vm70 = vcmask 261120
    %v72 = vsel %vm70, %v46, 0
    %74 = vmatprep.subr.bf16.mxu0 0
    %75 = vmatpush1.bf16.msra.mxu0 %v66
    %76 = vmatprep.subr.bf16.mxu0 0
    %77 = vmatpush1.bf16.msra.mxu0 %v67
    %78 = vmatprep.subr.bf16.mxu0 0
    %79 = vmatpush1.bf16.msra.mxu0 0
    %80 = vmatprep.subr.bf16.mxu0 0
    %81 = vmatpush1.bf16.msra.mxu0 0
    %82 = vmatprep.subr.bf16.mxu0 0
    %83 = vmatpush1.bf16.msra.mxu0 0
    %84 = vmatprep.subr.bf16.mxu0 0
    %85 = vmatpush1.bf16.msra.mxu0 0
    %86 = vmatprep.subr.bf16.mxu0 0
    %87 = vmatpush1.bf16.msra.mxu0 0
    %88 = vmatprep.subr.bf16.mxu0 0
    %89 = vmatpush1.bf16.msra.mxu0 0
    %90 = vmatprep.subr.bf16.mxu0 0
    %91 = vmatpush1.bf16.msra.mxu0 0
    %92 = vmatprep.subr.bf16.mxu0 0
    %93 = vmatpush1.bf16.msra.mxu0 0
    %94 = vmatprep.subr.bf16.mxu0 0
    %95 = vmatpush1.bf16.msra.mxu0 0
    %96 = vmatprep.subr.bf16.mxu0 0
    %97 = vmatpush1.bf16.msra.mxu0 0
    %98 = vmatprep.subr.bf16.mxu0 0
    %99 = vmatpush1.bf16.msra.mxu0 0
    %100 = vmatprep.subr.bf16.mxu0 0
    %101 = vmatpush1.bf16.msra.mxu0 0
    %102 = vmatprep.subr.bf16.mxu0 0
    %103 = vmatpush1.bf16.msra.mxu0 0
    %104 = vmatprep.subr.bf16.mxu0 0
    %105 = vmatpush1.bf16.msra.mxu0 0
    %106 = vmatprep.mubr.bf16.mxu0 0
    %107 = vmatmul.mubr.bf16.gmra.mrb[0].mxu0 %v72
    %v108 = vpop.f32.mrb[0].mxu0
    %v109 = vadd.f32 %v56, %v108
    %v110 = vpop.f32.mrb[0].mxu0
    %v111 = vpop.f32.mrb[0].mxu0
    %v112 = vadd.f32 %v56, %v111
    %v113 = vpop.f32.mrb[0].mxu0
    %114 = vdwg.mxu0
    %v115 = vpack.c.bf16 %v112, %v109
    %v117 = vunpack.c.l.b16 %v115
    %v118 = vunpack.c.h.b16 %v115
    %v119 = vpack.c.b16 %v117, %v117
    %v120 = vpack.c.b16 %v118, %v118
    %vm123 = vcmask 519168
    %124 = vst.msk [vmem:[#allocation7] sm:$0xf] %vm123, %v119
    %125 = vst.msk [vmem:[#allocation7 + $0x4] sm:$0xf] %vm123, %v120
    // Predicated region
    $region22: #{tpu_custom_call.1} parent=1 // pred_check
      _
    $region23: #{tpu_custom_call.1} parent=1 // pred_check_branch
      %127 = sbr.rel (0) target = $region25
    $region24: #{tpu_custom_call.1} parent=1 // pred_region
      %s129 = ssub.s32 128, 128
      %130 = vsyncadd [#allocation4], %s129
      %s131 = sshll.u32 [#allocation7], 4
      %s132 = int_to_ptr.vmem [resolvable:$true] %s131
      %137 = dma.vmem_to_hbm [thread:$0]  %s132, 128, %s3, [#allocation4], 64, 64, 4
    $region25: #{tpu_custom_call.1} parent=1 // pred_fallthru
      _
    // Predicated region
    $region26: #{tpu_custom_call.1} parent=1 // pred_check
      _
    $region27: #{tpu_custom_call.1} parent=1 // pred_check_branch
      %139 = sbr.rel (0) target = $region29
    $region28: #{tpu_custom_call.1} parent=1 // pred_region
      %140 = dma.done [#allocation4], 128
    $region29: #{tpu_custom_call.1} parent=1 // pred_fallthru
      _
    %141 = vsyncpa [#allocation3], 1
    %142 = vsyncpa [#allocation6], 1
    %143 = vsyncpa [#allocation4], 1

</llo_original>
